<compile_context>
chip_gen: v5e
topology: v5e:2x2
jax: 0.10.0
libtpu: 0.0.40
codegen_flags: <defaults>
</compile_context>

<pallas_src>
import functools

import jax
import jax.numpy as jnp
from jax.experimental import pallas as pl
from jax.experimental.pallas import tpu as pltpu

LANE = 128


def _round_up(x, m):
    return (x + m - 1) // m * m


def _critic_kernel(s_ref, w1_ref, b1_ref, w2_ref, b2_ref, w3_ref, b3_ref, o_ref,
                   *, use_tanh: bool):
    act = jnp.tanh if use_tanh else (lambda x: jnp.maximum(x, 0.0))

    # fc1 + act : (TB, Fs) @ (Fs, Fh) -> (TB, Fh)
    h1 = act(jnp.dot(s_ref[...], w1_ref[...],
                     preferred_element_type=jnp.float32) + b1_ref[...])
    # fc2 + act : (TB, Fh) @ (Fh, Fh) -> (TB, Fh)
    h2 = act(jnp.dot(h1, w2_ref[...],
                     preferred_element_type=jnp.float32) + b2_ref[...])
    # fc3 value head: contract hidden of h2 against the single w3 row, formulated as
    # (1, Fh) x (TB, Fh)^T -> (1, TB) so the result is lane-dense (no width-1 MXU output).
    v = jax.lax.dot_general(w3_ref[...], h2,
                            (((1,), (1,)), ((), ())),
                            preferred_element_type=jnp.float32)
    v = v + b3_ref[0, 0]                       # b3 scalar from SMEM
    o_ref[...] = v.reshape(o_ref.shape).astype(o_ref.dtype)


def critic_forward(s, w1, b1, w2, b2, w3, b3, *, use_tanh=True, tile_b=512):
    """s: [B, state_dim]; wK: [in, out]; bK: [1, out] (b3: [1,1]). Returns v_s: [B, 1]."""
    B, state_dim = s.shape
    hidden = w1.shape[1]
    f32 = jnp.float32

    # Lane-pad feature widths to 128; pad batch to a multiple of the batch tile.
    fs = _round_up(state_dim, LANE)
    fh = _round_up(hidden, LANE)
    tb = min(tile_b, _round_up(B, 8))          # whole (8-rounded) batch if it is small
    b_pad = _round_up(B, tb)
    grid_b = b_pad // tb

    # Host-side zero padding. Padded lanes stay exactly 0 through tanh/relu because the
    # corresponding weight rows/cols and bias lanes are 0, so results are unchanged.
    s_p = jnp.zeros((b_pad, fs), f32).at[:B, :state_dim].set(s.astype(f32))
    w1_p = jnp.zeros((fs, fh), f32).at[:state_dim, :hidden].set(w1.astype(f32))
    b1_p = jnp.zeros((1, fh), f32).at[:, :hidden].set(b1.reshape(1, -1).astype(f32))
    w2_p = jnp.zeros((fh, fh), f32).at[:hidden, :hidden].set(w2.astype(f32))
    b2_p = jnp.zeros((1, fh), f32).at[:, :hidden].set(b2.reshape(1, -1).astype(f32))
    w3_row = jnp.zeros((1, fh), f32).at[0, :hidden].set(w3[:, 0].astype(f32))
    b3_s = jnp.asarray(b3, f32).reshape(1, 1)

    resident = lambda i: (0, 0)                # weights/biases: constant block index

    out = pl.pallas_call(
        functools.partial(_critic_kernel, use_tanh=use_tanh),
        out_shape=jax.ShapeDtypeStruct((grid_b, 1, tb), f32),
        grid=(grid_b,),
        in_specs=[
            pl.BlockSpec((tb, fs), lambda i: (i, 0)),            # state tile (pipelined)
            pl.BlockSpec((fs, fh), resident),                    # w1 (VMEM-resident)
            pl.BlockSpec((1, fh), resident),                     # b1
            pl.BlockSpec((fh, fh), resident),                    # w2
            pl.BlockSpec((1, fh), resident),                     # b2
            pl.BlockSpec((1, fh), resident),                     # w3 as a row vector
            pl.BlockSpec(memory_space=pltpu.MemorySpace.SMEM),   # b3 scalar in SMEM
        ],
        out_specs=pl.BlockSpec((1, 1, tb), lambda i: (i, 0, 0)), # lane-dense value slab
        compiler_params=pltpu.CompilerParams(
            dimension_semantics=("parallel",)),
    )(s_p, w1_p, b1_p, w2_p, b2_p, w3_row, b3_s)

    # (G, 1, TB) lane-dense slab -> (B, 1)
    return out.reshape(-1)[:B].reshape(B, 1)


def orthogonal_init(key, in_dim, out_dim, gain=1.0):
    """Deterministic orthogonal init (mimics torch.nn.init.orthogonal_).
    Returns weight of shape [in_dim, out_dim] (already transposed for s @ W)."""
    rows, cols = out_dim, in_dim              # torch weight is [out, in]
    a = jax.random.normal(key, (max(rows, cols), min(rows, cols)), dtype=jnp.float32)
    q, r = jnp.linalg.qr(a)
    q = q * jnp.sign(jnp.diagonal(r))         # make decomposition unique
    if rows < cols:
        q = q.T
    w_torch = gain * q[:rows, :cols]          # [out, in]
    return w_torch.T                          # [in, out]


if __name__ == "__main__":
    # args: state_dim=16, hidden_width=32, use_tanh=1, use_orthogonal_init=True
    state_dim, hidden_width, batch = 16, 32, 8

    key = jax.random.PRNGKey(0)
    k_s, k1, k2, k3 = jax.random.split(key, 4)

    s = jax.random.normal(k_s, (batch, state_dim), dtype=jnp.float32)

    w1 = orthogonal_init(k1, state_dim, hidden_width)
    b1 = jnp.zeros((1, hidden_width), dtype=jnp.float32)
    w2 = orthogonal_init(k2, hidden_width, hidden_width)
    b2 = jnp.zeros((1, hidden_width), dtype=jnp.float32)
    w3 = orthogonal_init(k3, hidden_width, 1)
    b3 = jnp.zeros((1, 1), dtype=jnp.float32)

    v_s = critic_forward(s, w1, b1, w2, b2, w3, b3, use_tanh=True)
    jax.block_until_ready(v_s)

    # pure-JAX reference check (unpadded)
    ref = jnp.tanh(s @ w1 + b1)
    ref = jnp.tanh(ref @ w2 + b2)
    ref = ref @ w3 + b3
    assert v_s.shape == (batch, 1)
    assert jnp.allclose(v_s, ref, atol=1e-5, rtol=1e-5), "mismatch vs reference"

    # TODO(synk): save_checkpoint/load_checkpoint are host-side torch I/O, not kernel ops.
    print("KERNEL_OK")
</pallas_src>

<mosaic_0001>
module attributes {stable_mosaic.version = 11 : i64} {
  func.func @_critic_kernel(%arg0: i32, %arg1: memref<8x128xf32, #tpu.memory_space<vmem>>, %arg2: memref<128x128xf32, #tpu.memory_space<vmem>>, %arg3: memref<1x128xf32, #tpu.memory_space<vmem>>, %arg4: memref<128x128xf32, #tpu.memory_space<vmem>>, %arg5: memref<1x128xf32, #tpu.memory_space<vmem>>, %arg6: memref<1x128xf32, #tpu.memory_space<vmem>>, %arg7: memref<1x1xf32, #tpu.memory_space<smem>>, %arg8: memref<1x1x8xf32, #tpu.memory_space<vmem>>) attributes {dimension_semantics = [#tpu.dimension_semantics<parallel>], iteration_bounds = array<i64: 1>, scalar_prefetch = 0 : i64, scratch_operands = 0 : i64, tpu.core_type = #tpu.core_type<tc>, window_params = [{transform_indices = @transform_0, window_bounds = array<i64: 8, 128>}, {pipeline_mode = #tpu.pipeline_mode<synchronous>, transform_indices = @transform_1, window_bounds = array<i64: 128, 128>}, {pipeline_mode = #tpu.pipeline_mode<synchronous>, transform_indices = @transform_2, window_bounds = array<i64: 1, 128>}, {pipeline_mode = #tpu.pipeline_mode<synchronous>, transform_indices = @transform_3, window_bounds = array<i64: 128, 128>}, {pipeline_mode = #tpu.pipeline_mode<synchronous>, transform_indices = @transform_4, window_bounds = array<i64: 1, 128>}, {pipeline_mode = #tpu.pipeline_mode<synchronous>, transform_indices = @transform_5, window_bounds = array<i64: 1, 128>}, {transform_indices = @transform_6, window_bounds = array<i64: 1, 1>}, {transform_indices = @transform_7, window_bounds = array<i64: 1, 1, 8>}]} {
    %c0 = arith.constant 0 : index
    %c0_0 = arith.constant 0 : index
    %0 = vector.load %arg1[%c0, %c0_0] : memref<8x128xf32, #tpu.memory_space<vmem>>, vector<8x128xf32>
    %c0_1 = arith.constant 0 : index
    %c0_2 = arith.constant 0 : index
    %1 = vector.load %arg2[%c0_1, %c0_2] : memref<128x128xf32, #tpu.memory_space<vmem>>, vector<128x128xf32>
    %cst = arith.constant dense<0.000000e+00> : vector<8x128xf32>
    %2 = tpu.matmul %0, %1, %cst {dimension_numbers = #tpu.dot_dimension_numbers<[1], [0], [0], [1], [0, 0, 1, 1], [], []>} : vector<8x128xf32>, vector<128x128xf32>, vector<8x128xf32> -> vector<8x128xf32>
    %c0_3 = arith.constant 0 : index
    %c0_4 = arith.constant 0 : index
    %3 = vector.load %arg3[%c0_3, %c0_4] : memref<1x128xf32, #tpu.memory_space<vmem>>, vector<1x128xf32>
    %4 = vector.broadcast %3 : vector<1x128xf32> to vector<8x128xf32>
    %5 = arith.addf %2, %4 : vector<8x128xf32>
    %6 = math.tanh %5 : vector<8x128xf32>
    %c0_5 = arith.constant 0 : index
    %c0_6 = arith.constant 0 : index
    %7 = vector.load %arg4[%c0_5, %c0_6] : memref<128x128xf32, #tpu.memory_space<vmem>>, vector<128x128xf32>
    %cst_7 = arith.constant dense<0.000000e+00> : vector<8x128xf32>
    %8 = tpu.matmul %6, %7, %cst_7 {dimension_numbers = #tpu.dot_dimension_numbers<[1], [0], [0], [1], [0, 0, 1, 1], [], []>} : vector<8x128xf32>, vector<128x128xf32>, vector<8x128xf32> -> vector<8x128xf32>
    %c0_8 = arith.constant 0 : index
    %c0_9 = arith.constant 0 : index
    %9 = vector.load %arg5[%c0_8, %c0_9] : memref<1x128xf32, #tpu.memory_space<vmem>>, vector<1x128xf32>
    %10 = vector.broadcast %9 : vector<1x128xf32> to vector<8x128xf32>
    %11 = arith.addf %8, %10 : vector<8x128xf32>
    %12 = math.tanh %11 : vector<8x128xf32>
    %c0_10 = arith.constant 0 : index
    %c0_11 = arith.constant 0 : index
    %13 = vector.load %arg6[%c0_10, %c0_11] : memref<1x128xf32, #tpu.memory_space<vmem>>, vector<1x128xf32>
    %cst_12 = arith.constant dense<0.000000e+00> : vector<1x8xf32>
    %14 = tpu.matmul %13, %12, %cst_12 {dimension_numbers = #tpu.dot_dimension_numbers<[1], [1], [0], [0], [0, 0, 1, 0], [], []>} : vector<1x128xf32>, vector<8x128xf32>, vector<1x8xf32> -> vector<1x8xf32>
    %c0_13 = arith.constant 0 : index
    %c0_14 = arith.constant 0 : index
    %15 = memref.load %arg7[%c0_13, %c0_14] : memref<1x1xf32, #tpu.memory_space<smem>>
    %16 = vector.broadcast %15 : f32 to vector<1x8xf32>
    %17 = arith.addf %14, %16 : vector<1x8xf32>
    %18 = vector.shape_cast %17 : vector<1x8xf32> to vector<1x1x8xf32>
    %c0_15 = arith.constant 0 : index
    %c0_16 = arith.constant 0 : index
    %c0_17 = arith.constant 0 : index
    %19 = vector.load %arg8[%c0_15, %c0_16, %c0_17] : memref<1x1x8xf32, #tpu.memory_space<vmem>>, vector<1x1x8xf32>
    tpu.vector_store %arg8[%c0_15, %c0_16, %c0_17], %18 {strides = array<i32>} : memref<1x1x8xf32, #tpu.memory_space<vmem>>, vector<1x1x8xf32>,
    return
  }
  func.func @transform_0(%arg0: i32) -> (i32, i32) {
    %c0_i32 = arith.constant 0 : i32
    %c0_i32_0 = arith.constant 0 : i32
    return %arg0, %c0_i32 : i32, i32
  }
  func.func @transform_1(%arg0: i32) -> (i32, i32) {
    %c0_i32 = arith.constant 0 : i32
    %c0_i32_0 = arith.constant 0 : i32
    %c0_i32_1 = arith.constant 0 : i32
    return %c0_i32, %c0_i32_0 : i32, i32
  }
  func.func @transform_2(%arg0: i32) -> (i32, i32) {
    %c0_i32 = arith.constant 0 : i32
    %c0_i32_0 = arith.constant 0 : i32
    %c0_i32_1 = arith.constant 0 : i32
    return %c0_i32, %c0_i32_0 : i32, i32
  }
  func.func @transform_3(%arg0: i32) -> (i32, i32) {
    %c0_i32 = arith.constant 0 : i32
    %c0_i32_0 = arith.constant 0 : i32
    %c0_i32_1 = arith.constant 0 : i32
    return %c0_i32, %c0_i32_0 : i32, i32
  }
  func.func @transform_4(%arg0: i32) -> (i32, i32) {
    %c0_i32 = arith.constant 0 : i32
    %c0_i32_0 = arith.constant 0 : i32
    %c0_i32_1 = arith.constant 0 : i32
    return %c0_i32, %c0_i32_0 : i32, i32
  }
  func.func @transform_5(%arg0: i32) -> (i32, i32) {
    %c0_i32 = arith.constant 0 : i32
    %c0_i32_0 = arith.constant 0 : i32
    %c0_i32_1 = arith.constant 0 : i32
    return %c0_i32, %c0_i32_0 : i32, i32
  }
  func.func @transform_6(%arg0: i32) -> (i32, i32) {
    %c0_i32 = arith.constant 0 : i32
    %c0_i32_0 = arith.constant 0 : i32
    %c0_i32_1 = arith.constant 0 : i32
    return %c0_i32, %c0_i32_0 : i32, i32
  }
  func.func @transform_7(%arg0: i32) -> (i32, i32, i32) {
    %c0_i32 = arith.constant 0 : i32
    %c0_i32_0 = arith.constant 0 : i32
    %c0_i32_1 = arith.constant 0 : i32
    return %arg0, %c0_i32, %c0_i32_0 : i32, i32, i32
  }
}

</mosaic_0001>

<llo_original>
// kernel: tpu_custom_call.1
$region0: #{tpu_custom_call.1}
  #allocation0 [shape = 'u32[]', space=smem, size = 0x4, offset = 0x4, fixed_abs, tag = 'smem constant byte address 0x4 - core index']
  #allocation1 [shape = 'u32[72,128]{1,0:T(1,128)}', space=vmem, size = 0x9000, scoped, tag = 'internal scratch']
  #allocation2 [shape = 'f32[1,1]{1,0:T(1,128)S(6)}', space=smem, size = 0x200, scoped, tag = 'scoped memory for tpu_custom_call.1']
  %s0 = inlined_call_operand.hbm [shape: f32[8,128], index: 0, kind: input, shape index: {}]
  %s1 = inlined_call_operand.hbm [shape: f32[128,128], index: 1, kind: input, shape index: {}]
  %s2 = inlined_call_operand.vmem [shape: f32[1,128], index: 2, kind: input, shape index: {}]
  %s3 = inlined_call_operand.hbm [shape: f32[128,128], index: 3, kind: input, shape index: {}]
  %s4 = inlined_call_operand.vmem [shape: f32[1,128], index: 4, kind: input, shape index: {}]
  %s5 = inlined_call_operand.vmem [shape: f32[1,128], index: 5, kind: input, shape index: {}]
  %s6 = inlined_call_operand.<no memory space> [shape: f32[1,1], index: 6, kind: input, shape index: {}]
  %s7 = inlined_call_operand.hbm [shape: f32[1,1,8], index: 7, kind: output, shape index: {}]
  %s8 = sld [smem:[#allocation0]]
  $region50: #{tpu_custom_call.1} parent=0
    _
  %s10 = ssub.s32 1, %s8
  %s11 = scalar_select 0, %s10, %s8
  %12 = sst [smem:[#allocation2]] %s6
  $region1: #{tpu_custom_call.1} parent=0
    #allocation3 [shape = 'u8[4096]{0}', space=vmem, size = 0x1000, scoped, tag = 'input window, operand 0, single buffered']
    #allocation4 [shape = 's32[1]{0}', space=sflag, size = 0x4, scoped, tag = 'scoped memory for tpu_custom_call.1']
    #allocation5 [shape = 's32[1]{0}', space=sflag, size = 0x4, scoped, tag = 'scoped memory for tpu_custom_call.1']
    #allocation6 [shape = 'u8[65536]{0}', space=vmem, size = 0x10000, scoped, tag = 'input window, operand 1, single buffered']
    #allocation7 [shape = 's32[1]{0}', space=sflag, size = 0x4, scoped, tag = 'scoped memory for tpu_custom_call.1']
    #allocation8 [shape = 'u8[65536]{0}', space=vmem, size = 0x10000, scoped, tag = 'input window, operand 3, single buffered']
    #allocation9 [shape = 'u8[512]{0}', space=vmem, size = 0x400, scoped, tag = 'output window, operand 0, single buffered']
    %13 = vsyncpa [#allocation4], 0
    %14 = vsyncpa [#allocation7], 0
    %15 = vsyncpa [#allocation5], 0
    // Predicated region
    $region2: #{tpu_custom_call.1} parent=1 // pred_check
      _
    $region3: #{tpu_custom_call.1} parent=1 // pred_check_branch
      %17 = sbr.rel (0) target = $region5
    $region4: #{tpu_custom_call.1} parent=1 // pred_region
      %19 = vsyncadd [#allocation4], 0
      %s21 = sshll.u32 %s0, 4
      %s22 = int_to_ptr.hbm [resolvable:$true] %s21
      %s23 = sshll.u32 [#allocation3], 4
      %s24 = int_to_ptr.vmem [resolvable:$true] %s23
      %26 = dma.hbm_to_vmem [thread:$0]  %s22, 128, %s24, [#allocation4]
    $region5: #{tpu_custom_call.1} parent=1 // pred_fallthru
      _
    // Predicated region
    $region6: #{tpu_custom_call.1} parent=1 // pred_check
      _
    $region7: #{tpu_custom_call.1} parent=1 // pred_check_branch
      %28 = sbr.rel (0) target = $region9
    $region8: #{tpu_custom_call.1} parent=1 // pred_region
      %30 = vsyncadd [#allocation7], 0
      %s31 = sshll.u32 %s1, 4
      %s32 = int_to_ptr.hbm [resolvable:$true] %s31
      %s33 = sshll.u32 [#allocation6], 4
      %s34 = int_to_ptr.vmem [resolvable:$true] %s33
      %39 = dma.hbm_to_vmem [thread:$0]  %s32, 2048, %s34, [#allocation7], 128, 128, 8
    $region9: #{tpu_custom_call.1} parent=1 // pred_fallthru
      _
    // Predicated region
    $region10: #{tpu_custom_call.1} parent=1 // pred_check
      _
    $region11: #{tpu_custom_call.1} parent=1 // pred_check_branch
      %41 = sbr.rel (0) target = $region13
    $region12: #{tpu_custom_call.1} parent=1 // pred_region
      _
    $region13: #{tpu_custom_call.1} parent=1 // pred_fallthru
      _
    // Predicated region
    $region14: #{tpu_custom_call.1} parent=1 // pred_check
      _
    $region15: #{tpu_custom_call.1} parent=1 // pred_check_branch
      %43 = sbr.rel (0) target = $region17
    $region16: #{tpu_custom_call.1} parent=1 // pred_region
      %45 = vsyncadd [#allocation7], 0
      %s46 = sshll.u32 %s3, 4
      %s47 = int_to_ptr.hbm [resolvable:$true] %s46
      %s48 = sshll.u32 [#allocation8], 4
      %s49 = int_to_ptr.vmem [resolvable:$true] %s48
      %54 = dma.hbm_to_vmem [thread:$0]  %s47, 2048, %s49, [#allocation7], 128, 128, 8
    $region17: #{tpu_custom_call.1} parent=1 // pred_fallthru
      _
    // Predicated region
    $region18: #{tpu_custom_call.1} parent=1 // pred_check
      _
    $region19: #{tpu_custom_call.1} parent=1 // pred_check_branch
      %56 = sbr.rel (0) target = $region21
    $region20: #{tpu_custom_call.1} parent=1 // pred_region
      _
    $region21: #{tpu_custom_call.1} parent=1 // pred_fallthru
      _
    // Predicated region
    $region22: #{tpu_custom_call.1} parent=1 // pred_check
      _
    $region23: #{tpu_custom_call.1} parent=1 // pred_check_branch
      %58 = sbr.rel (0) target = $region25
    $region24: #{tpu_custom_call.1} parent=1 // pred_region
      _
    $region25: #{tpu_custom_call.1} parent=1 // pred_fallthru
      _
    // Predicated region
    $region26: #{tpu_custom_call.1} parent=1 // pred_check
      _
    $region27: #{tpu_custom_call.1} parent=1 // pred_check_branch
      %60 = sbr.rel (0) target = $region29
    $region28: #{tpu_custom_call.1} parent=1 // pred_region
      _
    $region29: #{tpu_custom_call.1} parent=1 // pred_fallthru
      _
    // Predicated region
    $region30: #{tpu_custom_call.1} parent=1 // pred_check
      _
    $region31: #{tpu_custom_call.1} parent=1 // pred_check_branch
      %62 = sbr.rel (0) target = $region33
    $region32: #{tpu_custom_call.1} parent=1 // pred_region
      %64 = dma.done [#allocation4], 128
    $region33: #{tpu_custom_call.1} parent=1 // pred_fallthru
      _
    // Predicated region
    $region34: #{tpu_custom_call.1} parent=1 // pred_check
      _
    $region35: #{tpu_custom_call.1} parent=1 // pred_check_branch
      %66 = sbr.rel (0) target = $region37
    $region36: #{tpu_custom_call.1} parent=1 // pred_region
      %68 = dma.done [#allocation7], 2048
    $region37: #{tpu_custom_call.1} parent=1 // pred_fallthru
      _
    // Predicated region
    $region38: #{tpu_custom_call.1} parent=1 // pred_check
      _
    $region39: #{tpu_custom_call.1} parent=1 // pred_check_branch
      %70 = sbr.rel (0) target = $region41
    $region40: #{tpu_custom_call.1} parent=1 // pred_region
      %72 = dma.done [#allocation7], 2048
    $region41: #{tpu_custom_call.1} parent=1 // pred_fallthru
      _
    %v73 = vld [vmem:[#allocation3] sm:$0xff]
    %v74 = vld [vmem:[#allocation6] sm:$0xff]
    %v75 = vld [vmem:[#allocation6 + $0x8] sm:$0xff]
    %v76 = vld [vmem:[#allocation6 + $0x10] sm:$0xff]
    %v77 = vld [vmem:[#allocation6 + $0x18] sm:$0xff]
    %v78 = vld [vmem:[#allocation6 + $0x20] sm:$0xff]
    %v79 = vld [vmem:[#allocation6 + $0x28] sm:$0xff]
    %v80 = vld [vmem:[#allocation6 + $0x30] sm:$0xff]
    %v81 = vld [vmem:[#allocation6 + $0x38] sm:$0xff]
    %v82 = vld [vmem:[#allocation6 + $0x40] sm:$0xff]
    %v83 = vld [vmem:[#allocation6 + $0x48] sm:$0xff]
    %v84 = vld [vmem:[#allocation6 + $0x50] sm:$0xff]
    %v85 = vld [vmem:[#allocation6 + $0x58] sm:$0xff]
    %v86 = vld [vmem:[#allocation6 + $0x60] sm:$0xff]
    %v87 = vld [vmem:[#allocation6 + $0x68] sm:$0xff]
    %v88 = vld [vmem:[#allocation6 + $0x70] sm:$0xff]
    %v89 = vld [vmem:[#allocation6 + $0x78] sm:$0xff]
    %v90 = vld [vmem:[%s2] sm:$0x1]
    %v92 = vperm.slane %v90, 0
    %94 = vmatpush.msra.mxu0 %v89
    %95 = vmatpush.msra.mxu0 %v88
    %96 = vmatpush.msra.mxu0 %v87
    %97 = vmatpush.msra.mxu0 %v86
    %98 = vmatpush.msra.mxu0 %v85
    %99 = vmatpush.msra.mxu0 %v84
    %100 = vmatpush.msra.mxu0 %v83
    %101 = vmatpush.msra.mxu0 %v82
    %102 = vmatpush.msra.mxu0 %v81
    %103 = vmatpush.msra.mxu0 %v80
    %104 = vmatpush.msra.mxu0 %v79
    %105 = vmatpush.msra.mxu0 %v78
    %106 = vmatpush.msra.mxu0 %v77
    %107 = vmatpush.msra.mxu0 %v76
    %108 = vmatpush.msra.mxu0 %v75
    %109 = vmatpush.msra.mxu0 %v74
    %110 = vmatmul.f32.gmra.mxu0 %v73
    %v111 = vpop.f32.mrf.mxu0
    %v112 = vadd.f32 %v92, %v111
    %113 = vdwg.mxu0
    %v114 = vtanh.pop %v112
    %v115 = vld [vmem:[#allocation8] sm:$0xff]
    %v116 = vld [vmem:[#allocation8 + $0x8] sm:$0xff]
    %v117 = vld [vmem:[#allocation8 + $0x10] sm:$0xff]
    %v118 = vld [vmem:[#allocation8 + $0x18] sm:$0xff]
    %v119 = vld [vmem:[#allocation8 + $0x20] sm:$0xff]
    %v120 = vld [vmem:[#allocation8 + $0x28] sm:$0xff]
    %v121 = vld [vmem:[#allocation8 + $0x30] sm:$0xff]
    %v122 = vld [vmem:[#allocation8 + $0x38] sm:$0xff]
    %v123 = vld [vmem:[#allocation8 + $0x40] sm:$0xff]
    %v124 = vld [vmem:[#allocation8 + $0x48] sm:$0xff]
    %v125 = vld [vmem:[#allocation8 + $0x50] sm:$0xff]
    %v126 = vld [vmem:[#allocation8 + $0x58] sm:$0xff]
    %v127 = vld [vmem:[#allocation8 + $0x60] sm:$0xff]
    %v128 = vld [vmem:[#allocation8 + $0x68] sm:$0xff]
    %v129 = vld [vmem:[#allocation8 + $0x70] sm:$0xff]
    %v130 = vld [vmem:[#allocation8 + $0x78] sm:$0xff]
    %v131 = vld [vmem:[%s4] sm:$0x1]
    %v133 = vperm.slane %v131, 0
    %135 = vmatpush.msra.mxu0 %v130
    %136 = vmatpush.msra.mxu0 %v129
    %137 = vmatpush.msra.mxu0 %v128
    %138 = vmatpush.msra.mxu0 %v127
    %139 = vmatpush.msra.mxu0 %v126
    %140 = vmatpush.msra.mxu0 %v125
    %141 = vmatpush.msra.mxu0 %v124
    %142 = vmatpush.msra.mxu0 %v123
    %143 = vmatpush.msra.mxu0 %v122
    %144 = vmatpush.msra.mxu0 %v121
    %145 = vmatpush.msra.mxu0 %v120
    %146 = vmatpush.msra.mxu0 %v119
    %147 = vmatpush.msra.mxu0 %v118
    %148 = vmatpush.msra.mxu0 %v117
    %149 = vmatpush.msra.mxu0 %v116
    %150 = vmatpush.msra.mxu0 %v115
    %151 = vmatmul.f32.gmra.mxu0 %v114
    %v152 = vpop.f32.mrf.mxu0
    %v153 = vadd.f32 %v133, %v152
    %154 = vdwg.mxu0
    %v155 = vtanh.pop %v153
    %v156 = vld [vmem:[%s5] sm:$0x1]
    %s157 = sld [smem:[#allocation2]]
    %v158 = vstv %s157
    %159 = vmatpush.xpose.msra.mxu0 0.0
    %160 = vmatpush.xpose.msra.mxu0 0.0
    %161 = vmatpush.xpose.msra.mxu0 0.0
    %162 = vmatpush.xpose.msra.mxu0 0.0
    %163 = vmatpush.xpose.msra.mxu0 0.0
    %164 = vmatpush.xpose.msra.mxu0 0.0
    %165 = vmatpush.xpose.msra.mxu0 0.0
    %166 = vmatpush.xpose.msra.mxu0 0.0
    %167 = vmatpush.xpose.msra.mxu0 0.0
    %168 = vmatpush.xpose.msra.mxu0 0.0
    %169 = vmatpush.xpose.msra.mxu0 0.0
    %170 = vmatpush.xpose.msra.mxu0 0.0
    %171 = vmatpush.xpose.msra.mxu0 0.0
    %172 = vmatpush.xpose.msra.mxu0 0.0
    %173 = vmatpush.xpose.msra.mxu0 0.0
    %174 = vmatpush.xpose.msra.mxu0 %v155
    %175 = vmatmul.f32.gmra.mxu0 %v156
    %v176 = vpop.f32.mrf.mxu0
    %v177 = vadd.f32 %v158, %v176
    %178 = vdwg.mxu0
    %vm179 = vcmask 57344
    %180 = vst.msk [vmem:[#allocation9] sm:$0x1] %vm179, %v177
    // Predicated region
    $region42: #{tpu_custom_call.1} parent=1 // pred_check
      _
    $region43: #{tpu_custom_call.1} parent=1 // pred_check_branch
      %182 = sbr.rel (0) target = $region45
    $region44: #{tpu_custom_call.1} parent=1 // pred_region
      %184 = vsyncadd [#allocation5], 0
      %s186 = sshll.u32 [#allocation9], 4
      %s187 = int_to_ptr.vmem [resolvable:$true] %s186
      %s188 = sshll.u32 %s7, 4
      %s189 = int_to_ptr.hbm [resolvable:$true] %s188
      %191 = dma.vmem_to_hbm [thread:$0]  %s187, 16, %s189, [#allocation5]
    $region45: #{tpu_custom_call.1} parent=1 // pred_fallthru
      _
    // Predicated region
    $region46: #{tpu_custom_call.1} parent=1 // pred_check
      _
    $region47: #{tpu_custom_call.1} parent=1 // pred_check_branch
      %193 = sbr.rel (0) target = $region49
    $region48: #{tpu_custom_call.1} parent=1 // pred_region
      %195 = dma.done [#allocation5], 16
    $region49: #{tpu_custom_call.1} parent=1 // pred_fallthru
      _
    %196 = vsyncpa [#allocation4], 1
    %197 = vsyncpa [#allocation7], 1
    %198 = vsyncpa [#allocation5], 1

</llo_original>
